<compile_context>
chip_gen: v7x
topology: tpu7x:2x2x1
jax: 0.10.0
libtpu: 0.0.40
codegen_flags: <defaults>
</compile_context>

<pallas_src>
import jax
import jax.numpy as jnp
import numpy as np
from jax.experimental import pallas as pl
from jax.experimental.pallas import tpu as pltpu


# ----------------------------- Pallas kernel --------------------------------
def _cfg_denoiser_kernel(params_ref,        # SMEM f32[4]: sigma, text_cfg, image_cfg, pad
                         z_ref,             # VMEM [C, T]   latent tile
                         ccc_ref,           # VMEM [C, T]   c_concat (cond)
                         ccu_ref,           # VMEM [C, T]   c_concat (uncond)
                         ctxc_ref,          # VMEM [D, S]   c_crossattn (cond), transposed
                         ctxu_ref,          # VMEM [D, S]   c_crossattn (uncond), transposed
                         w1z_ref,           # VMEM [C, C]   1x1-conv weight, z half (transposed)
                         w1c_ref,           # VMEM [C, C]   1x1-conv weight, c_concat half (transposed)
                         b1_ref,            # VMEM [C, 1]   1x1-conv bias
                         w2_ref,            # VMEM [C, D]   crossattn projection (transposed)
                         out_ref):          # VMEM [C, T]
    sigma = params_ref[0]
    text_cfg = params_ref[1]
    image_cfg = params_ref[2]

    # k-diffusion scalings (same sigma for all 3 replicas, as in the module)
    c_skip = 1.0 / (sigma * sigma + 1.0)
    c_out = sigma * jax.lax.rsqrt(sigma * sigma + 1.0)

    z = z_ref[...]                                   # [C, T]
    w1z = w1z_ref[...]                               # [C, C]
    w1c = w1c_ref[...]                               # [C, C]
    b1 = b1_ref[...]                                 # [C, 1]
    w2 = w2_ref[...]                                 # [C, D]

    # Shared z-half of the 1x1 conv (+ bias) — computed once for all branches.
    fz = jnp.dot(w1z, z, preferred_element_type=jnp.float32) + b1          # [C, T]

    # cond and img-cond share c_concat=cond; uncond uses c_concat=uncond.
    pre_c = fz + jnp.dot(w1c, ccc_ref[...], preferred_element_type=jnp.float32)  # [C, T]
    pre_u = fz + jnp.dot(w1c, ccu_ref[...], preferred_element_type=jnp.float32)  # [C, T]

    # Cross-attn context projections: mean over sequence, then [C,D]@[D,1].
    ctx_c = jnp.mean(ctxc_ref[...], axis=1, keepdims=True)                 # [D, 1]
    ctx_u = jnp.mean(ctxu_ref[...], axis=1, keepdims=True)                 # [D, 1]
    proj_c = jnp.dot(w2, ctx_c, preferred_element_type=jnp.float32)        # [C, 1]
    proj_u = jnp.dot(w2, ctx_u, preferred_element_type=jnp.float32)        # [C, 1]

    # Per-branch nonlinearity (only thing not shared).
    f_cond = jnp.tanh(pre_c + proj_c)      # c_concat=cond,   c_crossattn=cond
    f_img_cond = jnp.tanh(pre_c + proj_u)  # c_concat=cond,   c_crossattn=uncond
    f_uncond = jnp.tanh(pre_u + proj_u)    # c_concat=uncond, c_crossattn=uncond

    # Algebraically folded CFG combine: the c_skip*z terms cancel inside the
    # differences, so apply c_skip*z and c_out exactly once.
    f_cfg = (f_uncond
             + text_cfg * (f_cond - f_img_cond)
             + image_cfg * (f_img_cond - f_uncond))
    out_ref[...] = c_skip * z + c_out * f_cfg


# ------------------------------ JAX wrapper ----------------------------------
def _pick_spatial_tile(hw):
    """Largest lane-dense (multiple-of-128) tile dividing HW, capped at 2048.
    Falls back to the full extent when HW isn't 128-aligned."""
    if hw % 128 != 0:
        return hw
    for cand in (2048, 1024, 512, 256, 128):
        if hw % cand == 0:
            return cand
    return hw


def cfg_denoiser(z, sigma, cond, uncond, text_cfg_scale, image_cfg_scale, params):
    """z: [1, C, H, W] f32; sigma: [1] f32; cond/uncond mirror the PyTorch module."""
    w1, b1, w2 = params
    _, C, H, W = z.shape
    HW = H * W
    S, D = cond['c_crossattn'][0].shape[1:]

    # Big tensors: NCHW -> [C, HW] is a pure reshape (no data movement).
    z_f = z[0].reshape(C, HW)
    ccc = cond['c_concat'][0][0].reshape(C, HW)
    ccu = uncond['c_concat'][0][0].reshape(C, HW)

    # Tiny tensors: transpose in the wrapper so the kernel stays lane-dense.
    ctxc = jnp.transpose(cond['c_crossattn'][0][0])     # [D, S]
    ctxu = jnp.transpose(uncond['c_crossattn'][0][0])   # [D, S]
    w1z = jnp.transpose(w1[:C])                          # [C, C]
    w1c = jnp.transpose(w1[C:])                          # [C, C]
    b1t = jnp.transpose(b1)                              # [C, 1]
    w2t = jnp.transpose(w2)                              # [C, D]

    scal = jnp.array([sigma[0], text_cfg_scale, image_cfg_scale, 0.0], jnp.float32)

    tile = _pick_spatial_tile(HW)
    grid = (HW // tile,)

    out_flat = pl.pallas_call(
        _cfg_denoiser_kernel,
        out_shape=jax.ShapeDtypeStruct((C, HW), jnp.float32),
        grid=grid,
        in_specs=[
            pl.BlockSpec(memory_space=pltpu.SMEM),           # scalars
            pl.BlockSpec((C, tile), lambda i: (0, i)),       # z
            pl.BlockSpec((C, tile), lambda i: (0, i)),       # c_concat (cond)
            pl.BlockSpec((C, tile), lambda i: (0, i)),       # c_concat (uncond)
            pl.BlockSpec((D, S), lambda i: (0, 0)),          # c_crossattn (cond)
            pl.BlockSpec((D, S), lambda i: (0, 0)),          # c_crossattn (uncond)
            pl.BlockSpec((C, C), lambda i: (0, 0)),          # w1_z
            pl.BlockSpec((C, C), lambda i: (0, 0)),          # w1_c
            pl.BlockSpec((C, 1), lambda i: (0, 0)),          # b1
            pl.BlockSpec((C, D), lambda i: (0, 0)),          # w2
        ],
        out_specs=pl.BlockSpec((C, tile), lambda i: (0, i)),
        compiler_params=pltpu.CompilerParams(
            dimension_semantics=("parallel",)),              # shards across TCs on v7x
    )(scal, z_f, ccc, ccu, ctxc, ctxu, w1z, w1c, b1t, w2t)

    # back to NCHW [1, C, H, W] (free reshape)
    return out_flat.reshape(1, C, H, W)


# ------------------------- pure-JAX reference (check) ------------------------
def cfg_denoiser_ref(z, sigma, cond, uncond, text_cfg_scale, image_cfg_scale, params):
    w1, b1, w2 = params

    def inner_model(x, sig, c_concat, c_crossattn):
        # x: [N, C, H, W]; sig: [N]; c_concat: [N, C, H, W]; c_crossattn: [N, S, D]
        c_skip = 1.0 / (sig ** 2 + 1.0)
        c_out = sig / jnp.sqrt(sig ** 2 + 1.0)
        h = jnp.concatenate([x, c_concat], axis=1)           # [N, 2C, H, W]
        f = jnp.einsum('nchw,cd->ndhw', h, w1) + b1[0][None, :, None, None]
        ctx = jnp.mean(c_crossattn, axis=1)                  # [N, D]
        f = f + jnp.einsum('nd,dc->nc', ctx, w2)[:, :, None, None]
        f = jnp.tanh(f)
        return (c_skip[:, None, None, None] * x + c_out[:, None, None, None] * f)

    cfg_z = jnp.repeat(z, 3, axis=0)
    cfg_sigma = jnp.repeat(sigma, 3, axis=0)
    cc = jnp.concatenate([cond['c_crossattn'][0], uncond['c_crossattn'][0],
                          uncond['c_crossattn'][0]], axis=0)
    ccat = jnp.concatenate([cond['c_concat'][0], cond['c_concat'][0],
                            uncond['c_concat'][0]], axis=0)
    out = inner_model(cfg_z, cfg_sigma, ccat, cc)
    out_cond, out_img_cond, out_uncond = out[0:1], out[1:2], out[2:3]
    return (out_uncond + text_cfg_scale * (out_cond - out_img_cond)
            + image_cfg_scale * (out_img_cond - out_uncond))


# ----------------------------------- main ------------------------------------
if __name__ == "__main__":
    C, H, W = 4, 16, 16
    S, D = 8, 32

    key = jax.random.PRNGKey(0)
    ks = jax.random.split(key, 8)

    z = jax.random.normal(ks[0], (1, C, H, W), jnp.float32)
    sigma = jnp.array([1.7], jnp.float32)
    cond = {
        'c_crossattn': [jax.random.normal(ks[1], (1, S, D), jnp.float32)],
        'c_concat': [jax.random.normal(ks[2], (1, C, H, W), jnp.float32)],
    }
    uncond = {
        'c_crossattn': [jax.random.normal(ks[3], (1, S, D), jnp.float32)],
        'c_concat': [jnp.zeros((1, C, H, W), jnp.float32)],
    }
    text_cfg_scale = 7.5
    image_cfg_scale = 1.5

    # deterministic synthetic inner-model weights (1x1 conv + context projection)
    w1 = jax.random.normal(ks[4], (2 * C, C), jnp.float32) * 0.2
    b1 = jax.random.normal(ks[5], (1, C), jnp.float32) * 0.1
    w2 = jax.random.normal(ks[6], (D, C), jnp.float32) * 0.2
    params = (w1, b1, w2)

    out = cfg_denoiser(z, sigma, cond, uncond, text_cfg_scale, image_cfg_scale, params)
    out = jax.block_until_ready(out)

    ref = cfg_denoiser_ref(z, sigma, cond, uncond, text_cfg_scale, image_cfg_scale, params)
    np.testing.assert_allclose(np.asarray(out), np.asarray(ref), rtol=1e-5, atol=1e-5)

    assert out.shape == (1, C, H, W)
    print("KERNEL_OK")
</pallas_src>

<mosaic_0001>
module attributes {stable_mosaic.version = 11 : i64} {
  func.func @_cfg_denoiser_kernel(%arg0: i32, %arg1: memref<4xf32, #tpu.memory_space<smem>>, %arg2: memref<4x256xf32, #tpu.memory_space<vmem>>, %arg3: memref<4x256xf32, #tpu.memory_space<vmem>>, %arg4: memref<4x256xf32, #tpu.memory_space<vmem>>, %arg5: memref<32x8xf32, #tpu.memory_space<vmem>>, %arg6: memref<32x8xf32, #tpu.memory_space<vmem>>, %arg7: memref<4x4xf32, #tpu.memory_space<vmem>>, %arg8: memref<4x4xf32, #tpu.memory_space<vmem>>, %arg9: memref<4x1xf32, #tpu.memory_space<vmem>>, %arg10: memref<4x32xf32, #tpu.memory_space<vmem>>, %arg11: memref<4x256xf32, #tpu.memory_space<vmem>>) attributes {dimension_semantics = [#tpu.dimension_semantics<parallel>], iteration_bounds = array<i64: 1>, scalar_prefetch = 0 : i64, scratch_operands = 0 : i64, tpu.core_type = #tpu.core_type<tc>, window_params = [{transform_indices = @transform_0, window_bounds = array<i64: 4>}, {transform_indices = @transform_1, window_bounds = array<i64: 4, 256>}, {transform_indices = @transform_2, window_bounds = array<i64: 4, 256>}, {transform_indices = @transform_3, window_bounds = array<i64: 4, 256>}, {pipeline_mode = #tpu.pipeline_mode<synchronous>, transform_indices = @transform_4, window_bounds = array<i64: 32, 8>}, {pipeline_mode = #tpu.pipeline_mode<synchronous>, transform_indices = @transform_5, window_bounds = array<i64: 32, 8>}, {pipeline_mode = #tpu.pipeline_mode<synchronous>, transform_indices = @transform_6, window_bounds = array<i64: 4, 4>}, {pipeline_mode = #tpu.pipeline_mode<synchronous>, transform_indices = @transform_7, window_bounds = array<i64: 4, 4>}, {pipeline_mode = #tpu.pipeline_mode<synchronous>, transform_indices = @transform_8, window_bounds = array<i64: 4, 1>}, {pipeline_mode = #tpu.pipeline_mode<synchronous>, transform_indices = @transform_9, window_bounds = array<i64: 4, 32>}, {transform_indices = @transform_10, window_bounds = array<i64: 4, 256>}]} {
    %c0 = arith.constant 0 : index
    %0 = memref.load %arg1[%c0] : memref<4xf32, #tpu.memory_space<smem>>
    %c1 = arith.constant 1 : index
    %1 = memref.load %arg1[%c1] : memref<4xf32, #tpu.memory_space<smem>>
    %c2 = arith.constant 2 : index
    %2 = memref.load %arg1[%c2] : memref<4xf32, #tpu.memory_space<smem>>
    %3 = arith.mulf %0, %0 : f32
    %cst = arith.constant 1.000000e+00 : f32
    %4 = arith.addf %3, %cst : f32
    %cst_0 = arith.constant 1.000000e+00 : f32
    %5 = arith.divf %cst_0, %4 : f32
    %6 = arith.mulf %0, %0 : f32
    %cst_1 = arith.constant 1.000000e+00 : f32
    %7 = arith.addf %6, %cst_1 : f32
    %8 = math.rsqrt %7 : f32
    %9 = arith.mulf %0, %8 : f32
    %c0_2 = arith.constant 0 : index
    %c0_3 = arith.constant 0 : index
    %10 = vector.load %arg2[%c0_2, %c0_3] : memref<4x256xf32, #tpu.memory_space<vmem>>, vector<4x256xf32>
    %c0_4 = arith.constant 0 : index
    %c0_5 = arith.constant 0 : index
    %11 = vector.load %arg7[%c0_4, %c0_5] : memref<4x4xf32, #tpu.memory_space<vmem>>, vector<4x4xf32>
    %c0_6 = arith.constant 0 : index
    %c0_7 = arith.constant 0 : index
    %12 = vector.load %arg8[%c0_6, %c0_7] : memref<4x4xf32, #tpu.memory_space<vmem>>, vector<4x4xf32>
    %c0_8 = arith.constant 0 : index
    %c0_9 = arith.constant 0 : index
    %13 = vector.load %arg9[%c0_8, %c0_9] : memref<4x1xf32, #tpu.memory_space<vmem>>, vector<4x1xf32>
    %c0_10 = arith.constant 0 : index
    %c0_11 = arith.constant 0 : index
    %14 = vector.load %arg10[%c0_10, %c0_11] : memref<4x32xf32, #tpu.memory_space<vmem>>, vector<4x32xf32>
    %cst_12 = arith.constant dense<0.000000e+00> : vector<4x256xf32>
    %15 = tpu.matmul %11, %10, %cst_12 {dimension_numbers = #tpu.dot_dimension_numbers<[1], [0], [0], [1], [0, 0, 1, 1], [], []>} : vector<4x4xf32>, vector<4x256xf32>, vector<4x256xf32> -> vector<4x256xf32>
    %16 = vector.broadcast %13 : vector<4x1xf32> to vector<4x256xf32>
    %17 = arith.addf %15, %16 : vector<4x256xf32>
    %c0_13 = arith.constant 0 : index
    %c0_14 = arith.constant 0 : index
    %18 = vector.load %arg3[%c0_13, %c0_14] : memref<4x256xf32, #tpu.memory_space<vmem>>, vector<4x256xf32>
    %cst_15 = arith.constant dense<0.000000e+00> : vector<4x256xf32>
    %19 = tpu.matmul %12, %18, %cst_15 {dimension_numbers = #tpu.dot_dimension_numbers<[1], [0], [0], [1], [0, 0, 1, 1], [], []>} : vector<4x4xf32>, vector<4x256xf32>, vector<4x256xf32> -> vector<4x256xf32>
    %20 = arith.addf %17, %19 : vector<4x256xf32>
    %c0_16 = arith.constant 0 : index
    %c0_17 = arith.constant 0 : index
    %21 = vector.load %arg4[%c0_16, %c0_17] : memref<4x256xf32, #tpu.memory_space<vmem>>, vector<4x256xf32>
    %cst_18 = arith.constant dense<0.000000e+00> : vector<4x256xf32>
    %22 = tpu.matmul %12, %21, %cst_18 {dimension_numbers = #tpu.dot_dimension_numbers<[1], [0], [0], [1], [0, 0, 1, 1], [], []>} : vector<4x4xf32>, vector<4x256xf32>, vector<4x256xf32> -> vector<4x256xf32>
    %23 = arith.addf %17, %22 : vector<4x256xf32>
    %c0_19 = arith.constant 0 : index
    %c0_20 = arith.constant 0 : index
    %24 = vector.load %arg5[%c0_19, %c0_20] : memref<32x8xf32, #tpu.memory_space<vmem>>, vector<32x8xf32>
    %cst_21 = arith.constant dense<0.000000e+00> : vector<32xf32>
    %25 = vector.multi_reduction <add>, %24, %cst_21 [1] : vector<32x8xf32> to vector<32xf32>
    %26 = vector.shape_cast %25 : vector<32xf32> to vector<32x1xf32>
    %cst_22 = arith.constant 8.000000e+00 : f32
    %27 = vector.broadcast %cst_22 : f32 to vector<32x1xf32>
    %28 = arith.divf %26, %27 : vector<32x1xf32>
    %c0_23 = arith.constant 0 : index
    %c0_24 = arith.constant 0 : index
    %29 = vector.load %arg6[%c0_23, %c0_24] : memref<32x8xf32, #tpu.memory_space<vmem>>, vector<32x8xf32>
    %cst_25 = arith.constant dense<0.000000e+00> : vector<32xf32>
    %30 = vector.multi_reduction <add>, %29, %cst_25 [1] : vector<32x8xf32> to vector<32xf32>
    %31 = vector.shape_cast %30 : vector<32xf32> to vector<32x1xf32>
    %cst_26 = arith.constant 8.000000e+00 : f32
    %32 = vector.broadcast %cst_26 : f32 to vector<32x1xf32>
    %33 = arith.divf %31, %32 : vector<32x1xf32>
    %cst_27 = arith.constant dense<0.000000e+00> : vector<4x1xf32>
    %34 = tpu.matmul %14, %28, %cst_27 {dimension_numbers = #tpu.dot_dimension_numbers<[1], [0], [0], [1], [0, 0, 1, 1], [], []>} : vector<4x32xf32>, vector<32x1xf32>, vector<4x1xf32> -> vector<4x1xf32>
    %cst_28 = arith.constant dense<0.000000e+00> : vector<4x1xf32>
    %35 = tpu.matmul %14, %33, %cst_28 {dimension_numbers = #tpu.dot_dimension_numbers<[1], [0], [0], [1], [0, 0, 1, 1], [], []>} : vector<4x32xf32>, vector<32x1xf32>, vector<4x1xf32> -> vector<4x1xf32>
    %36 = vector.broadcast %34 : vector<4x1xf32> to vector<4x256xf32>
    %37 = arith.addf %20, %36 : vector<4x256xf32>
    %38 = math.tanh %37 : vector<4x256xf32>
    %39 = vector.broadcast %35 : vector<4x1xf32> to vector<4x256xf32>
    %40 = arith.addf %20, %39 : vector<4x256xf32>
    %41 = math.tanh %40 : vector<4x256xf32>
    %42 = vector.broadcast %35 : vector<4x1xf32> to vector<4x256xf32>
    %43 = arith.addf %23, %42 : vector<4x256xf32>
    %44 = math.tanh %43 : vector<4x256xf32>
    %45 = arith.subf %38, %41 : vector<4x256xf32>
    %46 = vector.broadcast %1 : f32 to vector<4x256xf32>
    %47 = arith.mulf %46, %45 : vector<4x256xf32>
    %48 = arith.addf %44, %47 : vector<4x256xf32>
    %49 = arith.subf %41, %44 : vector<4x256xf32>
    %50 = vector.broadcast %2 : f32 to vector<4x256xf32>
    %51 = arith.mulf %50, %49 : vector<4x256xf32>
    %52 = arith.addf %48, %51 : vector<4x256xf32>
    %53 = vector.broadcast %5 : f32 to vector<4x256xf32>
    %54 = arith.mulf %53, %10 : vector<4x256xf32>
    %55 = vector.broadcast %9 : f32 to vector<4x256xf32>
    %56 = arith.mulf %55, %52 : vector<4x256xf32>
    %57 = arith.addf %54, %56 : vector<4x256xf32>
    %c0_29 = arith.constant 0 : index
    %c0_30 = arith.constant 0 : index
    %58 = vector.load %arg11[%c0_29, %c0_30] : memref<4x256xf32, #tpu.memory_space<vmem>>, vector<4x256xf32>
    tpu.vector_store %arg11[%c0_29, %c0_30], %57 {strides = array<i32>} : memref<4x256xf32, #tpu.memory_space<vmem>>, vector<4x256xf32>,
    return
  }
  func.func @transform_0(%arg0: i32) -> i32 {
    %c0_i32 = arith.constant 0 : i32
    %c0_i32_0 = arith.constant 0 : i32
    return %c0_i32 : i32
  }
  func.func @transform_1(%arg0: i32) -> (i32, i32) {
    %c0_i32 = arith.constant 0 : i32
    %c0_i32_0 = arith.constant 0 : i32
    return %c0_i32, %arg0 : i32, i32
  }
  func.func @transform_2(%arg0: i32) -> (i32, i32) {
    %c0_i32 = arith.constant 0 : i32
    %c0_i32_0 = arith.constant 0 : i32
    return %c0_i32, %arg0 : i32, i32
  }
  func.func @transform_3(%arg0: i32) -> (i32, i32) {
    %c0_i32 = arith.constant 0 : i32
    %c0_i32_0 = arith.constant 0 : i32
    return %c0_i32, %arg0 : i32, i32
  }
  func.func @transform_4(%arg0: i32) -> (i32, i32) {
    %c0_i32 = arith.constant 0 : i32
    %c0_i32_0 = arith.constant 0 : i32
    %c0_i32_1 = arith.constant 0 : i32
    return %c0_i32, %c0_i32_0 : i32, i32
  }
  func.func @transform_5(%arg0: i32) -> (i32, i32) {
    %c0_i32 = arith.constant 0 : i32
    %c0_i32_0 = arith.constant 0 : i32
    %c0_i32_1 = arith.constant 0 : i32
    return %c0_i32, %c0_i32_0 : i32, i32
  }
  func.func @transform_6(%arg0: i32) -> (i32, i32) {
    %c0_i32 = arith.constant 0 : i32
    %c0_i32_0 = arith.constant 0 : i32
    %c0_i32_1 = arith.constant 0 : i32
    return %c0_i32, %c0_i32_0 : i32, i32
  }
  func.func @transform_7(%arg0: i32) -> (i32, i32) {
    %c0_i32 = arith.constant 0 : i32
    %c0_i32_0 = arith.constant 0 : i32
    %c0_i32_1 = arith.constant 0 : i32
    return %c0_i32, %c0_i32_0 : i32, i32
  }
  func.func @transform_8(%arg0: i32) -> (i32, i32) {
    %c0_i32 = arith.constant 0 : i32
    %c0_i32_0 = arith.constant 0 : i32
    %c0_i32_1 = arith.constant 0 : i32
    return %c0_i32, %c0_i32_0 : i32, i32
  }
  func.func @transform_9(%arg0: i32) -> (i32, i32) {
    %c0_i32 = arith.constant 0 : i32
    %c0_i32_0 = arith.constant 0 : i32
    %c0_i32_1 = arith.constant 0 : i32
    return %c0_i32, %c0_i32_0 : i32, i32
  }
  func.func @transform_10(%arg0: i32) -> (i32, i32) {
    %c0_i32 = arith.constant 0 : i32
    %c0_i32_0 = arith.constant 0 : i32
    return %c0_i32, %arg0 : i32, i32
  }
}

</mosaic_0001>

<llo_original>
// kernel: tpu_custom_call.1
$region0: #{tpu_custom_call.1}
  #allocation0 [shape = 'u32[]', space=smem, size = 0x4, offset = 0x4, fixed_abs, tag = 'smem constant byte address 0x4 - core index']
  #allocation1 [shape = 'u32[144,128]{1,0:T(1,128)}', space=vmem, size = 0x12000, scoped, tag = 'internal scratch']
  %s0 = inlined_call_operand.vmem [shape: f32[4], index: 0, kind: input, shape index: {}]
  %s1 = inlined_call_operand.vmem [shape: f32[4,256], index: 1, kind: input, shape index: {}]
  %s2 = inlined_call_operand.vmem [shape: f32[4,256], index: 2, kind: input, shape index: {}]
  %s3 = inlined_call_operand.vmem [shape: f32[4,256], index: 3, kind: input, shape index: {}]
  %s4 = inlined_call_operand.vmem [shape: f32[32,8], index: 4, kind: input, shape index: {}]
  %s5 = inlined_call_operand.vmem [shape: f32[32,8], index: 5, kind: input, shape index: {}]
  %s6 = inlined_call_operand.vmem [shape: f32[4,4], index: 6, kind: input, shape index: {}]
  %s7 = inlined_call_operand.vmem [shape: f32[4,4], index: 7, kind: input, shape index: {}]
  %s8 = inlined_call_operand.vmem [shape: f32[4,1], index: 8, kind: input, shape index: {}]
  %s9 = inlined_call_operand.vmem [shape: f32[4,32], index: 9, kind: input, shape index: {}]
  %s10 = inlined_call_operand.hbm [shape: f32[4,256], index: 10, kind: output, shape index: {}]
  %s11 = sld [smem:[#allocation0]]
  $region54: #{tpu_custom_call.1} parent=0
    _
  %s13 = ssub.s32 1, %s11
  %s14 = scalar_select 0, %s13, %s11
  $region1: #{tpu_custom_call.1} parent=0
    #allocation2 [shape = 'u8[512]{0}', space=smem, size = 0x200, scoped, tag = 'input window, operand 0, single buffered']
    #allocation3 [shape = 's32[1]{0}', space=sflag, size = 0x4, scoped, tag = 'scoped memory for tpu_custom_call.1']
    #allocation4 [shape = 's32[1]{0}', space=sflag, size = 0x4, scoped, tag = 'scoped memory for tpu_custom_call.1']
    #allocation5 [shape = 'u8[4096]{0}', space=vmem, size = 0x1000, scoped, tag = 'output window, operand 0, single buffered']
    %15 = vsyncpa [#allocation4], 0
    %16 = vsyncpa [#allocation3], 0
    // Predicated region
    $region2: #{tpu_custom_call.1} parent=1 // pred_check
      _
    $region3: #{tpu_custom_call.1} parent=1 // pred_check_branch
      %18 = sbr.rel (0) target = $region5
    $region4: #{tpu_custom_call.1} parent=1 // pred_region
      %s20 = ssub.s32 16, 16
      %21 = vsyncadd [#allocation4], %s20
      %s23 = sshll.u32 %s0, 4
      %s24 = int_to_ptr.vmem [resolvable:$true] %s23
      %26 = dma.vmem_to_smem %s24, 16, [#allocation2], [#allocation4]
    $region5: #{tpu_custom_call.1} parent=1 // pred_fallthru
      _
    // Predicated region
    $region6: #{tpu_custom_call.1} parent=1 // pred_check
      _
    $region7: #{tpu_custom_call.1} parent=1 // pred_check_branch
      %28 = sbr.rel (0) target = $region9
    $region8: #{tpu_custom_call.1} parent=1 // pred_region
      _
    $region9: #{tpu_custom_call.1} parent=1 // pred_fallthru
      _
    // Predicated region
    $region10: #{tpu_custom_call.1} parent=1 // pred_check
      _
    $region11: #{tpu_custom_call.1} parent=1 // pred_check_branch
      %30 = sbr.rel (0) target = $region13
    $region12: #{tpu_custom_call.1} parent=1 // pred_region
      _
    $region13: #{tpu_custom_call.1} parent=1 // pred_fallthru
      _
    // Predicated region
    $region14: #{tpu_custom_call.1} parent=1 // pred_check
      _
    $region15: #{tpu_custom_call.1} parent=1 // pred_check_branch
      %32 = sbr.rel (0) target = $region17
    $region16: #{tpu_custom_call.1} parent=1 // pred_region
      _
    $region17: #{tpu_custom_call.1} parent=1 // pred_fallthru
      _
    // Predicated region
    $region18: #{tpu_custom_call.1} parent=1 // pred_check
      _
    $region19: #{tpu_custom_call.1} parent=1 // pred_check_branch
      %34 = sbr.rel (0) target = $region21
    $region20: #{tpu_custom_call.1} parent=1 // pred_region
      _
    $region21: #{tpu_custom_call.1} parent=1 // pred_fallthru
      _
    // Predicated region
    $region22: #{tpu_custom_call.1} parent=1 // pred_check
      _
    $region23: #{tpu_custom_call.1} parent=1 // pred_check_branch
      %36 = sbr.rel (0) target = $region25
    $region24: #{tpu_custom_call.1} parent=1 // pred_region
      _
    $region25: #{tpu_custom_call.1} parent=1 // pred_fallthru
      _
    // Predicated region
    $region26: #{tpu_custom_call.1} parent=1 // pred_check
      _
    $region27: #{tpu_custom_call.1} parent=1 // pred_check_branch
      %38 = sbr.rel (0) target = $region29
    $region28: #{tpu_custom_call.1} parent=1 // pred_region
      _
    $region29: #{tpu_custom_call.1} parent=1 // pred_fallthru
      _
    // Predicated region
    $region30: #{tpu_custom_call.1} parent=1 // pred_check
      _
    $region31: #{tpu_custom_call.1} parent=1 // pred_check_branch
      %40 = sbr.rel (0) target = $region33
    $region32: #{tpu_custom_call.1} parent=1 // pred_region
      _
    $region33: #{tpu_custom_call.1} parent=1 // pred_fallthru
      _
    // Predicated region
    $region34: #{tpu_custom_call.1} parent=1 // pred_check
      _
    $region35: #{tpu_custom_call.1} parent=1 // pred_check_branch
      %42 = sbr.rel (0) target = $region37
    $region36: #{tpu_custom_call.1} parent=1 // pred_region
      _
    $region37: #{tpu_custom_call.1} parent=1 // pred_fallthru
      _
    // Predicated region
    $region38: #{tpu_custom_call.1} parent=1 // pred_check
      _
    $region39: #{tpu_custom_call.1} parent=1 // pred_check_branch
      %44 = sbr.rel (0) target = $region41
    $region40: #{tpu_custom_call.1} parent=1 // pred_region
      _
    $region41: #{tpu_custom_call.1} parent=1 // pred_fallthru
      _
    // Predicated region
    $region42: #{tpu_custom_call.1} parent=1 // pred_check
      _
    $region43: #{tpu_custom_call.1} parent=1 // pred_check_branch
      %46 = sbr.rel (0) target = $region45
    $region44: #{tpu_custom_call.1} parent=1 // pred_region
      %47 = dma.done [#allocation4], 16
    $region45: #{tpu_custom_call.1} parent=1 // pred_fallthru
      _
    %48 = sfence
    %s49 = sld [smem:[#allocation2]]
    %s50 = sld [smem:[#allocation2 + $0x1]]
    %s51 = sld [smem:[#allocation2 + $0x2]]
    %s52 = smul.f32 %s49, %s49
    %s53 = sadd.f32 %s52, 1.0
    %v54 = vstv %s53
    %v55 = vrcp.pop %v54
    %s56 = vtos %v55
    %v57 = vstv %s53
    %v58 = vrsqrt.pop %v57
    %s59 = vtos %v58
    %s60 = smul.f32 %s49, %s59
    %v61 = vld [vmem:[%s1] sm:$0xff]
    %v62 = vld [vmem:[%s6] sm:$0xf]
    %v63 = vld [vmem:[%s7] sm:$0xf]
    %v64 = vld [vmem:[%s8] sm:$0xf]
    %v65 = vld [vmem:[%s9] sm:$0xf]
    %67 = vset.pattern.permute.xlu0 0
    %68 = vperm.xlu0 %67, %v64
    %v69 = vpop.permute.xlu0 %68
    %v72 = vcombine.high %v61, %v61
    %vm73 = vcmask 31744
    %v75 = vsel %vm73, %v62, 0
    %vm77 = vcmask 1043456
    %v78 = vsel %vm77, %v61, 0
    %v80 = vsel %vm77, %v72, 0
    %82 = vmatprep.subr.mxu0 %v80
    %83 = vmatpush1.msra.mxu0 %v78
    %84 = vmatprep.subr.mxu0 0.0
    %85 = vmatpush1.msra.mxu0 0.0
    %86 = vmatprep.subr.mxu0 0.0
    %87 = vmatpush1.msra.mxu0 0.0
    %88 = vmatprep.subr.mxu0 0.0
    %89 = vmatpush1.msra.mxu0 0.0
    %90 = vmatprep.subr.mxu0 0.0
    %91 = vmatpush1.msra.mxu0 0.0
    %92 = vmatprep.subr.mxu0 0.0
    %93 = vmatpush1.msra.mxu0 0.0
    %94 = vmatprep.subr.mxu0 0.0
    %95 = vmatpush1.msra.mxu0 0.0
    %96 = vmatprep.subr.mxu0 0.0
    %97 = vmatpush1.msra.mxu0 0.0
    %98 = vmatprep.subr.mxu0 0.0
    %99 = vmatpush1.msra.mxu0 0.0
    %100 = vmatprep.subr.mxu0 0.0
    %101 = vmatpush1.msra.mxu0 0.0
    %102 = vmatprep.subr.mxu0 0.0
    %103 = vmatpush1.msra.mxu0 0.0
    %104 = vmatprep.subr.mxu0 0.0
    %105 = vmatpush1.msra.mxu0 0.0
    %106 = vmatprep.subr.mxu0 0.0
    %107 = vmatpush1.msra.mxu0 0.0
    %108 = vmatprep.subr.mxu0 0.0
    %109 = vmatpush1.msra.mxu0 0.0
    %110 = vmatprep.subr.mxu0 0.0
    %111 = vmatpush1.msra.mxu0 0.0
    %112 = vmatprep.subr.mxu0 0.0
    %113 = vmatpush1.msra.mxu0 0.0
    %114 = vmatprep.subr.mxu0 0.0
    %115 = vmatpush1.msra.mxu0 0.0
    %116 = vmatprep.subr.mxu0 0.0
    %117 = vmatpush1.msra.mxu0 0.0
    %118 = vmatprep.subr.mxu0 0.0
    %119 = vmatpush1.msra.mxu0 0.0
    %120 = vmatprep.subr.mxu0 0.0
    %121 = vmatpush1.msra.mxu0 0.0
    %122 = vmatprep.subr.mxu0 0.0
    %123 = vmatpush1.msra.mxu0 0.0
    %124 = vmatprep.subr.mxu0 0.0
    %125 = vmatpush1.msra.mxu0 0.0
    %126 = vmatprep.subr.mxu0 0.0
    %127 = vmatpush1.msra.mxu0 0.0
    %128 = vmatprep.subr.mxu0 0.0
    %129 = vmatpush1.msra.mxu0 0.0
    %130 = vmatprep.subr.mxu0 0.0
    %131 = vmatpush1.msra.mxu0 0.0
    %132 = vmatprep.subr.mxu0 0.0
    %133 = vmatpush1.msra.mxu0 0.0
    %134 = vmatprep.subr.mxu0 0.0
    %135 = vmatpush1.msra.mxu0 0.0
    %136 = vmatprep.subr.mxu0 0.0
    %137 = vmatpush1.msra.mxu0 0.0
    %138 = vmatprep.subr.mxu0 0.0
    %139 = vmatpush1.msra.mxu0 0.0
    %140 = vmatprep.subr.mxu0 0.0
    %141 = vmatpush1.msra.mxu0 0.0
    %142 = vmatprep.subr.mxu0 0.0
    %143 = vmatpush1.msra.mxu0 0.0
    %144 = vmatprep.subr.mxu0 0.0
    %145 = vmatpush1.msra.mxu0 0.0
    %146 = vmatprep.mubr.f32.mxu0 0.0
    %147 = vmatmul.mubr.f32.gmra.mrb[0].mxu0 %v75
    %v148 = vpop.f32.mrb[0].mxu0
    %v149 = vadd.f32 %v69, %v148
    %v150 = vpop.f32.mrb[0].mxu0
    %v151 = vadd.f32 %v69, %v150
    %152 = vdwg.mxu0
    %v153 = vld [vmem:[%s2] sm:$0xff]
    %v155 = vcombine.high %v153, %v153
    %v157 = vsel %vm73, %v63, 0
    %v159 = vsel %vm77, %v153, 0
    %v161 = vsel %vm77, %v155, 0
    %163 = vmatprep.subr.mxu0 %v161
    %164 = vmatpush1.msra.mxu0 %v159
    %165 = vmatprep.subr.mxu0 0.0
    %166 = vmatpush1.msra.mxu0 0.0
    %167 = vmatprep.subr.mxu0 0.0
    %168 = vmatpush1.msra.mxu0 0.0
    %169 = vmatprep.subr.mxu0 0.0
    %170 = vmatpush1.msra.mxu0 0.0
    %171 = vmatprep.subr.mxu0 0.0
    %172 = vmatpush1.msra.mxu0 0.0
    %173 = vmatprep.subr.mxu0 0.0
    %174 = vmatpush1.msra.mxu0 0.0
    %175 = vmatprep.subr.mxu0 0.0
    %176 = vmatpush1.msra.mxu0 0.0
    %177 = vmatprep.subr.mxu0 0.0
    %178 = vmatpush1.msra.mxu0 0.0
    %179 = vmatprep.subr.mxu0 0.0
    %180 = vmatpush1.msra.mxu0 0.0
    %181 = vmatprep.subr.mxu0 0.0
    %182 = vmatpush1.msra.mxu0 0.0
    %183 = vmatprep.subr.mxu0 0.0
    %184 = vmatpush1.msra.mxu0 0.0
    %185 = vmatprep.subr.mxu0 0.0
    %186 = vmatpush1.msra.mxu0 0.0
    %187 = vmatprep.subr.mxu0 0.0
    %188 = vmatpush1.msra.mxu0 0.0
    %189 = vmatprep.subr.mxu0 0.0
    %190 = vmatpush1.msra.mxu0 0.0
    %191 = vmatprep.subr.mxu0 0.0
    %192 = vmatpush1.msra.mxu0 0.0
    %193 = vmatprep.subr.mxu0 0.0
    %194 = vmatpush1.msra.mxu0 0.0
    %195 = vmatprep.subr.mxu0 0.0
    %196 = vmatpush1.msra.mxu0 0.0
    %197 = vmatprep.subr.mxu0 0.0
    %198 = vmatpush1.msra.mxu0 0.0
    %199 = vmatprep.subr.mxu0 0.0
    %200 = vmatpush1.msra.mxu0 0.0
    %201 = vmatprep.subr.mxu0 0.0
    %202 = vmatpush1.msra.mxu0 0.0
    %203 = vmatprep.subr.mxu0 0.0
    %204 = vmatpush1.msra.mxu0 0.0
    %205 = vmatprep.subr.mxu0 0.0
    %206 = vmatpush1.msra.mxu0 0.0
    %207 = vmatprep.subr.mxu0 0.0
    %208 = vmatpush1.msra.mxu0 0.0
    %209 = vmatprep.subr.mxu0 0.0
    %210 = vmatpush1.msra.mxu0 0.0
    %211 = vmatprep.subr.mxu0 0.0
    %212 = vmatpush1.msra.mxu0 0.0
    %213 = vmatprep.subr.mxu0 0.0
    %214 = vmatpush1.msra.mxu0 0.0
    %215 = vmatprep.subr.mxu0 0.0
    %216 = vmatpush1.msra.mxu0 0.0
    %217 = vmatprep.subr.mxu0 0.0
    %218 = vmatpush1.msra.mxu0 0.0
    %219 = vmatprep.subr.mxu0 0.0
    %220 = vmatpush1.msra.mxu0 0.0
    %221 = vmatprep.subr.mxu0 0.0
    %222 = vmatpush1.msra.mxu0 0.0
    %223 = vmatprep.subr.mxu0 0.0
    %224 = vmatpush1.msra.mxu0 0.0
    %225 = vmatprep.subr.mxu0 0.0
    %226 = vmatpush1.msra.mxu0 0.0
    %227 = vmatprep.mubr.f32.mxu0 0.0
    %228 = vmatmul.mubr.f32.gmra.mrb[0].mxu0 %v157
    %v229 = vpop.f32.mrb[0].mxu0
    %v230 = vadd.f32 0.0, %v229
    %v231 = vpop.f32.mrb[0].mxu0
    %v232 = vadd.f32 0.0, %v231
    %233 = vdwg.mxu0
    %v234 = vadd.f32 %v149, %v230
    %v235 = vadd.f32 %v151, %v232
    %v236 = vld [vmem:[%s3] sm:$0xff]
    %v238 = vcombine.high %v236, %v236
    %v239 = vsel %vm77, %v236, 0
    %v241 = vsel %vm77, %v238, 0
    %243 = vmatprep.subr.mxu0 %v241
    %244 = vmatpush1.msra.mxu0 %v239
    %245 = vmatprep.subr.mxu0 0.0
    %246 = vmatpush1.msra.mxu0 0.0
    %247 = vmatprep.subr.mxu0 0.0
    %248 = vmatpush1.msra.mxu0 0.0
    %249 = vmatprep.subr.mxu0 0.0
    %250 = vmatpush1.msra.mxu0 0.0
    %251 = vmatprep.subr.mxu0 0.0
    %252 = vmatpush1.msra.mxu0 0.0
    %253 = vmatprep.subr.mxu0 0.0
    %254 = vmatpush1.msra.mxu0 0.0
    %255 = vmatprep.subr.mxu0 0.0
    %256 = vmatpush1.msra.mxu0 0.0
    %257 = vmatprep.subr.mxu0 0.0
    %258 = vmatpush1.msra.mxu0 0.0
    %259 = vmatprep.subr.mxu0 0.0
    %260 = vmatpush1.msra.mxu0 0.0
    %261 = vmatprep.subr.mxu0 0.0
    %262 = vmatpush1.msra.mxu0 0.0
    %263 = vmatprep.subr.mxu0 0.0
    %264 = vmatpush1.msra.mxu0 0.0
    %265 = vmatprep.subr.mxu0 0.0
    %266 = vmatpush1.msra.mxu0 0.0
    %267 = vmatprep.subr.mxu0 0.0
    %268 = vmatpush1.msra.mxu0 0.0
    %269 = vmatprep.subr.mxu0 0.0
    %270 = vmatpush1.msra.mxu0 0.0
    %271 = vmatprep.subr.mxu0 0.0
    %272 = vmatpush1.msra.mxu0 0.0
    %273 = vmatprep.subr.mxu0 0.0
    %274 = vmatpush1.msra.mxu0 0.0
    %275 = vmatprep.subr.mxu0 0.0
    %276 = vmatpush1.msra.mxu0 0.0
    %277 = vmatprep.subr.mxu0 0.0
    %278 = vmatpush1.msra.mxu0 0.0
    %279 = vmatprep.subr.mxu0 0.0
    %280 = vmatpush1.msra.mxu0 0.0
    %281 = vmatprep.subr.mxu0 0.0
    %282 = vmatpush1.msra.mxu0 0.0
    %283 = vmatprep.subr.mxu0 0.0
    %284 = vmatpush1.msra.mxu0 0.0
    %285 = vmatprep.subr.mxu0 0.0
    %286 = vmatpush1.msra.mxu0 0.0
    %287 = vmatprep.subr.mxu0 0.0
    %288 = vmatpush1.msra.mxu0 0.0
    %289 = vmatprep.subr.mxu0 0.0
    %290 = vmatpush1.msra.mxu0 0.0
    %291 = vmatprep.subr.mxu0 0.0
    %292 = vmatpush1.msra.mxu0 0.0
    %293 = vmatprep.subr.mxu0 0.0
    %294 = vmatpush1.msra.mxu0 0.0
    %295 = vmatprep.subr.mxu0 0.0
    %296 = vmatpush1.msra.mxu0 0.0
    %297 = vmatprep.subr.mxu0 0.0
    %298 = vmatpush1.msra.mxu0 0.0
    %299 = vmatprep.subr.mxu0 0.0
    %300 = vmatpush1.msra.mxu0 0.0
    %301 = vmatprep.subr.mxu0 0.0
    %302 = vmatpush1.msra.mxu0 0.0
    %303 = vmatprep.subr.mxu0 0.0
    %304 = vmatpush1.msra.mxu0 0.0
    %305 = vmatprep.subr.mxu0 0.0
    %306 = vmatpush1.msra.mxu0 0.0
    %307 = vmatprep.mubr.f32.mxu0 0.0
    %308 = vmatmul.mubr.f32.gmra.mrb[0].mxu0 %v157
    %v309 = vpop.f32.mrb[0].mxu0
    %v310 = vadd.f32 0.0, %v309
    %v311 = vpop.f32.mrb[0].mxu0
    %v312 = vadd.f32 0.0, %v311
    %313 = vdwg.mxu0
    %v314 = vadd.f32 %v149, %v310
    %v315 = vadd.f32 %v151, %v312
    %v316 = vld [vmem:[%s4] sm:$0xff]
    %v317 = vld [vmem:[%s4 + $0x8] sm:$0xff]
    %v318 = vld [vmem:[%s4 + $0x10] sm:$0xff]
    %v319 = vld [vmem:[%s4 + $0x18] sm:$0xff]
    %vm320 = vcmask 64512
    %v321 = vsel %vm320, %v316, 0.0
    %322 = vadd.xlane.f32.xlu0 %v321
    %v323 = vpop.xlane.xlu0 %322
    %v324 = vsel %vm320, %v317, 0.0
    %325 = vadd.xlane.f32.xlu0 %v324
    %v326 = vpop.xlane.xlu0 %325
    %v327 = vsel %vm320, %v318, 0.0
    %328 = vadd.xlane.f32.xlu0 %v327
    %v329 = vpop.xlane.xlu0 %328
    %v330 = vsel %vm320, %v319, 0.0
    %331 = vadd.xlane.f32.xlu0 %v330
    %v332 = vpop.xlane.xlu0 %331
    %v333 = vrcp.pop 8.0
    %v334 = vmul.f32 %v323, %v333
    %v335 = vmul.f32 %v326, %v333
    %v336 = vmul.f32 %v329, %v333
    %v337 = vmul.f32 %v332, %v333
    %v338 = vld [vmem:[%s5] sm:$0xff]
    %v339 = vld [vmem:[%s5 + $0x8] sm:$0xff]
    %v340 = vld [vmem:[%s5 + $0x10] sm:$0xff]
    %v341 = vld [vmem:[%s5 + $0x18] sm:$0xff]
    %v342 = vsel %vm320, %v338, 0.0
    %343 = vadd.xlane.f32.xlu0 %v342
    %v344 = vpop.xlane.xlu0 %343
    %v345 = vsel %vm320, %v339, 0.0
    %346 = vadd.xlane.f32.xlu0 %v345
    %v347 = vpop.xlane.xlu0 %346
    %v348 = vsel %vm320, %v340, 0.0
    %349 = vadd.xlane.f32.xlu0 %v348
    %v350 = vpop.xlane.xlu0 %349
    %v351 = vsel %vm320, %v341, 0.0
    %352 = vadd.xlane.f32.xlu0 %v351
    %v353 = vpop.xlane.xlu0 %352
    %v354 = vmul.f32 %v344, %v333
    %v355 = vmul.f32 %v347, %v333
    %v356 = vmul.f32 %v350, %v333
    %v357 = vmul.f32 %v353, %v333
    %vm358 = vcmask 261120
    %v360 = vsel %vm358, %v65, 0
    %362 = vmatprep.subr.mxu0 0.0
    %363 = vmatpush1.msra.mxu0 %v334
    %364 = vmatprep.subr.mxu0 0.0
    %365 = vmatpush1.msra.mxu0 %v335
    %366 = vmatprep.subr.mxu0 0.0
    %367 = vmatpush1.msra.mxu0 %v336
    %368 = vmatprep.subr.mxu0 0.0
    %369 = vmatpush1.msra.mxu0 %v337
    %370 = vmatprep.subr.mxu0 0.0
    %371 = vmatpush1.msra.mxu0 0.0
    %372 = vmatprep.subr.mxu0 0.0
    %373 = vmatpush1.msra.mxu0 0.0
    %374 = vmatprep.subr.mxu0 0.0
    %375 = vmatpush1.msra.mxu0 0.0
    %376 = vmatprep.subr.mxu0 0.0
    %377 = vmatpush1.msra.mxu0 0.0
    %378 = vmatprep.subr.mxu0 0.0
    %379 = vmatpush1.msra.mxu0 0.0
    %380 = vmatprep.subr.mxu0 0.0
    %381 = vmatpush1.msra.mxu0 0.0
    %382 = vmatprep.subr.mxu0 0.0
    %383 = vmatpush1.msra.mxu0 0.0
    %384 = vmatprep.subr.mxu0 0.0
    %385 = vmatpush1.msra.mxu0 0.0
    %386 = vmatprep.subr.mxu0 0.0
    %387 = vmatpush1.msra.mxu0 0.0
    %388 = vmatprep.subr.mxu0 0.0
    %389 = vmatpush1.msra.mxu0 0.0
    %390 = vmatprep.subr.mxu0 0.0
    %391 = vmatpush1.msra.mxu0 0.0
    %392 = vmatprep.subr.mxu0 0.0
    %393 = vmatpush1.msra.mxu0 0.0
    %394 = vmatprep.subr.mxu0 0.0
    %395 = vmatpush1.msra.mxu0 0.0
    %396 = vmatprep.subr.mxu0 0.0
    %397 = vmatpush1.msra.mxu0 0.0
    %398 = vmatprep.subr.mxu0 0.0
    %399 = vmatpush1.msra.mxu0 0.0
    %400 = vmatprep.subr.mxu0 0.0
    %401 = vmatpush1.msra.mxu0 0.0
    %402 = vmatprep.subr.mxu0 0.0
    %403 = vmatpush1.msra.mxu0 0.0
    %404 = vmatprep.subr.mxu0 0.0
    %405 = vmatpush1.msra.mxu0 0.0
    %406 = vmatprep.subr.mxu0 0.0
    %407 = vmatpush1.msra.mxu0 0.0
    %408 = vmatprep.subr.mxu0 0.0
    %409 = vmatpush1.msra.mxu0 0.0
    %410 = vmatprep.subr.mxu0 0.0
    %411 = vmatpush1.msra.mxu0 0.0
    %412 = vmatprep.subr.mxu0 0.0
    %413 = vmatpush1.msra.mxu0 0.0
    %414 = vmatprep.subr.mxu0 0.0
    %415 = vmatpush1.msra.mxu0 0.0
    %416 = vmatprep.subr.mxu0 0.0
    %417 = vmatpush1.msra.mxu0 0.0
    %418 = vmatprep.subr.mxu0 0.0
    %419 = vmatpush1.msra.mxu0 0.0
    %420 = vmatprep.subr.mxu0 0.0
    %421 = vmatpush1.msra.mxu0 0.0
    %422 = vmatprep.subr.mxu0 0.0
    %423 = vmatpush1.msra.mxu0 0.0
    %424 = vmatprep.subr.mxu0 0.0
    %425 = vmatpush1.msra.mxu0 0.0
    %426 = vmatprep.mubr.f32.mxu0 0.0
    %427 = vmatmul.mubr.f32.gmra.mrb[0].mxu0 %v360
    %v428 = vpop.f32.mrb[0].mxu0
    %v429 = vadd.f32 0.0, %v428
    %v430 = vpop.f32.mrb[0].mxu0
    %431 = vdwg.mxu0
    %432 = vmatprep.subr.mxu0 0.0
    %433 = vmatpush1.msra.mxu0 %v354
    %434 = vmatprep.subr.mxu0 0.0
    %435 = vmatpush1.msra.mxu0 %v355
    %436 = vmatprep.subr.mxu0 0.0
    %437 = vmatpush1.msra.mxu0 %v356
    %438 = vmatprep.subr.mxu0 0.0
    %439 = vmatpush1.msra.mxu0 %v357
    %440 = vmatprep.subr.mxu0 0.0
    %441 = vmatpush1.msra.mxu0 0.0
    %442 = vmatprep.subr.mxu0 0.0
    %443 = vmatpush1.msra.mxu0 0.0
    %444 = vmatprep.subr.mxu0 0.0
    %445 = vmatpush1.msra.mxu0 0.0
    %446 = vmatprep.subr.mxu0 0.0
    %447 = vmatpush1.msra.mxu0 0.0
    %448 = vmatprep.subr.mxu0 0.0
    %449 = vmatpush1.msra.mxu0 0.0
    %450 = vmatprep.subr.mxu0 0.0
    %451 = vmatpush1.msra.mxu0 0.0
    %452 = vmatprep.subr.mxu0 0.0
    %453 = vmatpush1.msra.mxu0 0.0
    %454 = vmatprep.subr.mxu0 0.0
    %455 = vmatpush1.msra.mxu0 0.0
    %456 = vmatprep.subr.mxu0 0.0
    %457 = vmatpush1.msra.mxu0 0.0
    %458 = vmatprep.subr.mxu0 0.0
    %459 = vmatpush1.msra.mxu0 0.0
    %460 = vmatprep.subr.mxu0 0.0
    %461 = vmatpush1.msra.mxu0 0.0
    %462 = vmatprep.subr.mxu0 0.0
    %463 = vmatpush1.msra.mxu0 0.0
    %464 = vmatprep.subr.mxu0 0.0
    %465 = vmatpush1.msra.mxu0 0.0
    %466 = vmatprep.subr.mxu0 0.0
    %467 = vmatpush1.msra.mxu0 0.0
    %468 = vmatprep.subr.mxu0 0.0
    %469 = vmatpush1.msra.mxu0 0.0
    %470 = vmatprep.subr.mxu0 0.0
    %471 = vmatpush1.msra.mxu0 0.0
    %472 = vmatprep.subr.mxu0 0.0
    %473 = vmatpush1.msra.mxu0 0.0
    %474 = vmatprep.subr.mxu0 0.0
    %475 = vmatpush1.msra.mxu0 0.0
    %476 = vmatprep.subr.mxu0 0.0
    %477 = vmatpush1.msra.mxu0 0.0
    %478 = vmatprep.subr.mxu0 0.0
    %479 = vmatpush1.msra.mxu0 0.0
    %480 = vmatprep.subr.mxu0 0.0
    %481 = vmatpush1.msra.mxu0 0.0
    %482 = vmatprep.subr.mxu0 0.0
    %483 = vmatpush1.msra.mxu0 0.0
    %484 = vmatprep.subr.mxu0 0.0
    %485 = vmatpush1.msra.mxu0 0.0
    %486 = vmatprep.subr.mxu0 0.0
    %487 = vmatpush1.msra.mxu0 0.0
    %488 = vmatprep.subr.mxu0 0.0
    %489 = vmatpush1.msra.mxu0 0.0
    %490 = vmatprep.subr.mxu0 0.0
    %491 = vmatpush1.msra.mxu0 0.0
    %492 = vmatprep.subr.mxu0 0.0
    %493 = vmatpush1.msra.mxu0 0.0
    %494 = vmatprep.subr.mxu0 0.0
    %495 = vmatpush1.msra.mxu0 0.0
    %496 = vmatprep.mubr.f32.mxu0 0.0
    %497 = vmatmul.mubr.f32.gmra.mrb[0].mxu0 %v360
    %v498 = vpop.f32.mrb[0].mxu0
    %v499 = vadd.f32 0.0, %v498
    %v500 = vpop.f32.mrb[0].mxu0
    %501 = vdwg.mxu0
    %503 = vset.pattern.permute.xlu0 0
    %504 = vperm.xlu0 %503, %v429
    %v505 = vpop.permute.xlu0 %504
    %v507 = vadd.f32 %v234, %v505
    %v508 = vadd.f32 %v235, %v505
    %v509 = vtanh.pop %v507
    %v510 = vtanh.pop %v508
    %512 = vset.pattern.permute.xlu0 0
    %513 = vperm.xlu0 %512, %v499
    %v514 = vpop.permute.xlu0 %513
    %v516 = vadd.f32 %v234, %v514
    %v517 = vadd.f32 %v235, %v514
    %v518 = vtanh.pop %v516
    %v519 = vtanh.pop %v517
    %v520 = vadd.f32 %v314, %v514
    %v521 = vadd.f32 %v315, %v514
    %v522 = vtanh.pop %v520
    %v523 = vtanh.pop %v521
    %v524 = vsub.f32 %v509, %v518
    %v525 = vsub.f32 %v510, %v519
    %v526 = vstv %s50
    %v527 = vmul.f32 %v526, %v524
    %v528 = vmul.f32 %v526, %v525
    %v529 = vadd.f32 %v522, %v527
    %v530 = vadd.f32 %v523, %v528
    %v531 = vsub.f32 %v518, %v522
    %v532 = vsub.f32 %v519, %v523
    %v533 = vstv %s51
    %v534 = vmul.f32 %v533, %v531
    %v535 = vmul.f32 %v533, %v532
    %v536 = vadd.f32 %v529, %v534
    %v537 = vadd.f32 %v530, %v535
    %v538 = vstv %s56
    %v539 = vmul.f32 %v538, %v61
    %v540 = vstv %s60
    %v541 = vmul.f32 %v540, %v536
    %v542 = vmul.f32 %v540, %v537
    %v545 = vcombine.low %v541, %v542
    %v547 = vadd.f32 %v539, %v545
    %548 = vst [vmem:[#allocation5] sm:$0xff] %v547
    // Predicated region
    $region46: #{tpu_custom_call.1} parent=1 // pred_check
      _
    $region47: #{tpu_custom_call.1} parent=1 // pred_check_branch
      %550 = sbr.rel (0) target = $region49
    $region48: #{tpu_custom_call.1} parent=1 // pred_region
      %s552 = ssub.s32 128, 128
      %553 = vsyncadd [#allocation3], %s552
      %s555 = sshll.u32 [#allocation5], 4
      %s556 = int_to_ptr.vmem [resolvable:$true] %s555
      %558 = dma.vmem_to_hbm [thread:$0]  %s556, 128, %s10, [#allocation3]
    $region49: #{tpu_custom_call.1} parent=1 // pred_fallthru
      _
    // Predicated region
    $region50: #{tpu_custom_call.1} parent=1 // pred_check
      _
    $region51: #{tpu_custom_call.1} parent=1 // pred_check_branch
      %560 = sbr.rel (0) target = $region53
    $region52: #{tpu_custom_call.1} parent=1 // pred_region
      %561 = dma.done [#allocation3], 128
    $region53: #{tpu_custom_call.1} parent=1 // pred_fallthru
      _
    %562 = vsyncpa [#allocation3], 1
    %563 = vsyncpa [#allocation4], 1

</llo_original>
